<compile_context>
chip_gen: v6e
topology: v6e:2x2x1
jax: 0.10.0
libtpu: 0.0.40
codegen_flags: <defaults>
</compile_context>

<pallas_src>
import functools
import math

import jax
import jax.numpy as jnp
from jax import lax
from jax.experimental import pallas as pl
from jax.experimental.pallas import tpu as pltpu

_LANE = 128
_SUBLANE = 8


def _round_up(v, m):
    return ((v + m - 1) // m) * m


def _cdiv(a, b):
    return (a + b - 1) // b


def _vmem_budget_bytes():
    """~75% of per-core VMEM; conservative 48 MiB if the query fails."""
    cap = 64 << 20
    try:
        info = pltpu.get_tpu_info()
        cap = int(getattr(info, "vmem_capacity_bytes", cap))
    except Exception:
        pass
    return int(cap * 3 // 4)


def _choose_batch_tiling(batch, row_width, target_bytes):
    """Pick (tile_rows, padded_rows).

    Minimizes batch padding, targets ~target_bytes per f32 row-block, and
    prefers >=2 tiles when batch >= 16 so the 'parallel' axis can shard across
    both v7x TensorCores (no-op on v5e/v6e).
    """
    b_pad8 = _round_up(max(batch, 1), _SUBLANE)
    target_rows = max(_SUBLANE, min(1024, target_bytes // max(row_width * 4, 1)))
    min_tiles = _cdiv(b_pad8, target_rows)
    if b_pad8 >= 2 * _SUBLANE:
        min_tiles = max(min_tiles, 2)
    best = None
    for nt in range(min_tiles, min_tiles + 8):
        tb = _round_up(_cdiv(b_pad8, nt), _SUBLANE)
        nt_eff = _cdiv(b_pad8, tb)
        pad = tb * nt_eff - b_pad8
        key = (pad, nt_eff)
        if best is None or key < best[0]:
            best = (key, tb, tb * nt_eff)
    return best[1], best[2]


def _largest_dividing_tile(n_pad, candidates=(512, 256, 128)):
    for c in candidates:
        if n_pad % c == 0:
            return c
    return n_pad


# --------------------------------------------------------------------------- #
# Resident-W path: W stays in VMEM, all n_iter iterations run inside the kernel.
# --------------------------------------------------------------------------- #
def _recursive_unit_kernel(x_ref, w_ref, o_ref, *, n_iter, act_fn):
    """One (TB, Npad) batch tile: x <- act_fn(x @ W), repeated n_iter times."""
    w_dtype = w_ref.dtype

    def step(x):
        # Stream W from its VMEM ref each iteration (do not hoist into a single
        # long-lived value: that inflates vreg / VMEM-temp pressure on big tiles).
        y = jnp.dot(x.astype(w_dtype), w_ref[...],
                    preferred_element_type=jnp.float32)
        if act_fn is not None:
            y = act_fn(y)
        return y.astype(jnp.float32)

    x = x_ref[...].astype(jnp.float32)        # f32 carry
    if n_iter <= 8:
        for _ in range(n_iter):               # short chains: full static unroll
            x = step(x)
    else:
        # long chains: fori_loop bounds live ranges; small unroll for scheduling
        x = lax.fori_loop(0, n_iter, lambda _, v: step(v), x, unroll=2)
    o_ref[...] = x.astype(o_ref.dtype)


# --------------------------------------------------------------------------- #
# Tiled fallback: one single_pass per pallas_call, K/N-tiled with f32 accumulator.
# Used when W (double-buffered) + tiles would not fit the VMEM budget.
# --------------------------------------------------------------------------- #
def _tiled_step_kernel(x_ref, w_ref, o_ref, acc_ref, *, act_fn):
    @pl.when(pl.program_id(2) == 0)
    def _():
        acc_ref[...] = jnp.zeros_like(acc_ref)

    acc_ref[...] += jnp.dot(x_ref[...].astype(w_ref.dtype), w_ref[...],
                            preferred_element_type=jnp.float32)

    @pl.when(pl.program_id(2) == pl.num_programs(2) - 1)
    def _():
        y = acc_ref[...]
        if act_fn is not None:
            y = act_fn(y)
        o_ref[...] = y.astype(o_ref.dtype)


@functools.partial(jax.jit, static_argnums=(2, 3, 4, 5))
def recursive_unit_forward(x, w, n_iter=1, act_fn=None, matmul_dtype=None,
                           force_tiled=False):
    """Pallas TPU equivalent of RecursiveUnit.forward(x, n_iter).

    matmul_dtype: optionally cast W / matmul operands (e.g. jnp.bfloat16) for
    2-4x MXU throughput on v6e/v7x; the loop carry stays f32.
    """
    B, N = x.shape
    assert w.shape == (N, N), f"weights must be ({N},{N}), got {w.shape}"

    n_pad = _round_up(N, _LANE)
    x_item = jnp.dtype(x.dtype).itemsize

    wp = w if matmul_dtype is None else w.astype(matmul_dtype)
    w_item = jnp.dtype(wp.dtype).itemsize

    vmem_budget = _vmem_budget_bytes()

    # ---- resident-W path viability ------------------------------------------
    tb, b_pad = _choose_batch_tiling(B, n_pad, target_bytes=512 * 1024)
    w_res_bytes = 2 * n_pad * n_pad * w_item            # W double-buffered
    io_tile_bytes = tb * n_pad * x_item                 # one x/out HBM-dtype tile
    carry_bytes = tb * n_pad * 4                        # f32 in-kernel temps
    resident_need = w_res_bytes + 4 * io_tile_bytes + 3 * carry_bytes + (2 << 20)
    use_resident = (not force_tiled) and (resident_need <= vmem_budget)

    if use_resident:
        xp = x
        if (b_pad, n_pad) != (B, N):
            # Zero-padded W rows/cols guarantee padded lanes never leak into
            # real output columns, even when act_fn(0) != 0.
            xp = jnp.pad(x, ((0, b_pad - B), (0, n_pad - N)))
        wpp = wp
        if n_pad != N:
            wpp = jnp.pad(wp, ((0, n_pad - N), (0, n_pad - N)))

        vmem_limit = int(min(vmem_budget, max(resident_need + (4 << 20), 32 << 20)))
        cost = pl.CostEstimate(
            flops=2 * b_pad * n_pad * n_pad * n_iter,
            bytes_accessed=2 * b_pad * n_pad * x_item + n_pad * n_pad * w_item,
            transcendentals=(b_pad * n_pad * n_iter) if act_fn is not None else 0,
        )

        kernel = functools.partial(_recursive_unit_kernel,
                                   n_iter=n_iter, act_fn=act_fn)
        out = pl.pallas_call(
            kernel,
            out_shape=jax.ShapeDtypeStruct((b_pad, n_pad), x.dtype),
            grid=(b_pad // tb,),
            in_specs=[
                pl.BlockSpec((tb, n_pad), lambda i: (i, 0)),     # x: batch-tiled
                pl.BlockSpec((n_pad, n_pad), lambda i: (0, 0)),  # W: VMEM-resident
            ],
            out_specs=pl.BlockSpec((tb, n_pad), lambda i: (i, 0)),
            input_output_aliases={0: 0},                         # reuse padded x
            compiler_params=pltpu.CompilerParams(
                dimension_semantics=("parallel",),               # megacore on v7x
                vmem_limit_bytes=vmem_limit,
            ),
            cost_estimate=cost,
        )(xp, wpp)

        if (b_pad, n_pad) != (B, N):
            out = out[:B, :N]
        return out

    # ---- tiled fallback (large N or force_tiled) -----------------------------
    tk = _largest_dividing_tile(n_pad)
    tn = tk
    tm, b_pad = _choose_batch_tiling(B, tk, target_bytes=256 * 1024)

    xp = x
    if (b_pad, n_pad) != (B, N):
        xp = jnp.pad(x, ((0, b_pad - B), (0, n_pad - N)))
    wpp = wp
    if n_pad != N:
        wpp = jnp.pad(wp, ((0, n_pad - N), (0, n_pad - N)))

    fallback_need = (2 * (tm * tk * x_item + tk * tn * w_item + tm * tn * x_item)
                     + tm * tn * 4 + (2 << 20))
    vmem_limit = int(min(vmem_budget, max(fallback_need + (4 << 20), 32 << 20)))
    cost = pl.CostEstimate(
        flops=2 * b_pad * n_pad * n_pad,
        bytes_accessed=(b_pad * n_pad * x_item * (n_pad // tn)
                        + n_pad * n_pad * w_item * (b_pad // tm)
                        + b_pad * n_pad * x_item),
        transcendentals=(b_pad * n_pad) if act_fn is not None else 0,
    )

    kernel = functools.partial(_tiled_step_kernel, act_fn=act_fn)
    single_pass = pl.pallas_call(
        kernel,
        out_shape=jax.ShapeDtypeStruct((b_pad, n_pad), x.dtype),
        grid=(b_pad // tm, n_pad // tn, n_pad // tk),
        in_specs=[
            pl.BlockSpec((tm, tk), lambda i, j, k: (i, k)),
            pl.BlockSpec((tk, tn), lambda i, j, k: (k, j)),
        ],
        out_specs=pl.BlockSpec((tm, tn), lambda i, j, k: (i, j)),
        scratch_shapes=[pltpu.VMEM((tm, tn), jnp.float32)],
        compiler_params=pltpu.CompilerParams(
            dimension_semantics=("parallel", "parallel", "arbitrary"),
            vmem_limit_bytes=vmem_limit,
        ),
        cost_estimate=cost,
    )

    cur = xp
    for _ in range(n_iter):
        cur = single_pass(cur, wpp)

    if (b_pad, n_pad) != (B, N):
        cur = cur[:B, :N]
    return cur


def init_recursive_weights(key, n_cells, self_connect=False):
    """Deterministic init matching RecursiveUnit.init_weights()."""
    w = jax.random.normal(key, (n_cells, n_cells), dtype=jnp.float32)
    w = w / math.sqrt(n_cells)
    if not self_connect:
        w = w * (1.0 - jnp.eye(n_cells, dtype=jnp.float32))
    return w


if __name__ == "__main__":
    key = jax.random.PRNGKey(0)
    kx, kw, kx2 = jax.random.split(key, 3)

    # --- Case 1: module defaults (act_fn=None), B=8, n_cells=32, resident path.
    B, N_CELLS, N_ITER = 8, 32, 3
    x = jax.random.normal(kx, (B, N_CELLS), dtype=jnp.float32)
    w = init_recursive_weights(kw, N_CELLS, self_connect=False)

    out = jax.block_until_ready(recursive_unit_forward(x, w, N_ITER, None))
    ref = x
    for _ in range(N_ITER):
        ref = ref @ w
    assert out.shape == (B, N_CELLS)
    assert jnp.allclose(out, ref, atol=2e-4, rtol=2e-4), "mismatch vs reference (case 1)"

    # --- Case 2: B=272 -> two 136-row tiles (no over-padding), tanh activation.
    B2, N_ITER2 = 272, 2
    x2 = jax.random.normal(kx2, (B2, N_CELLS), dtype=jnp.float32)
    out2 = jax.block_until_ready(recursive_unit_forward(x2, w, N_ITER2, jnp.tanh))
    ref2 = x2
    for _ in range(N_ITER2):
        ref2 = jnp.tanh(ref2 @ w)
    assert out2.shape == (B2, N_CELLS)
    assert jnp.allclose(out2, ref2, atol=1e-3, rtol=1e-3), "mismatch vs reference (case 2)"

    # --- Case 3: exercise the large-N tiled fallback path at small shapes.
    out3 = jax.block_until_ready(
        recursive_unit_forward(x2, w, N_ITER2, jnp.tanh, None, True))
    assert out3.shape == (B2, N_CELLS)
    assert jnp.allclose(out3, ref2, atol=1e-3, rtol=1e-3), "mismatch vs reference (case 3)"

    print("KERNEL_OK")
</pallas_src>

<mosaic_0001>
module attributes {stable_mosaic.version = 11 : i64} {
  func.func @_recursive_unit_kernel(%arg0: i32, %arg1: memref<8x128xf32, #tpu.memory_space<vmem>>, %arg2: memref<128x128xf32, #tpu.memory_space<vmem>>, %arg3: memref<8x128xf32, #tpu.memory_space<vmem>>) attributes {dimension_semantics = [#tpu.dimension_semantics<parallel>], iteration_bounds = array<i64: 1>, scalar_prefetch = 0 : i64, scratch_operands = 0 : i64, tpu.core_type = #tpu.core_type<tc>, window_params = [{transform_indices = @transform_0, window_bounds = array<i64: 8, 128>}, {pipeline_mode = #tpu.pipeline_mode<synchronous>, transform_indices = @transform_1, window_bounds = array<i64: 128, 128>}, {transform_indices = @transform_2, window_bounds = array<i64: 8, 128>}]} {
    %c0 = arith.constant 0 : index
    %c0_0 = arith.constant 0 : index
    %0 = vector.load %arg1[%c0, %c0_0] : memref<8x128xf32, #tpu.memory_space<vmem>>, vector<8x128xf32>
    %c0_1 = arith.constant 0 : index
    %c0_2 = arith.constant 0 : index
    %1 = vector.load %arg2[%c0_1, %c0_2] : memref<128x128xf32, #tpu.memory_space<vmem>>, vector<128x128xf32>
    %cst = arith.constant dense<0.000000e+00> : vector<8x128xf32>
    %2 = tpu.matmul %0, %1, %cst {dimension_numbers = #tpu.dot_dimension_numbers<[1], [0], [0], [1], [0, 0, 1, 1], [], []>} : vector<8x128xf32>, vector<128x128xf32>, vector<8x128xf32> -> vector<8x128xf32>
    %c0_3 = arith.constant 0 : index
    %c0_4 = arith.constant 0 : index
    %3 = vector.load %arg2[%c0_3, %c0_4] : memref<128x128xf32, #tpu.memory_space<vmem>>, vector<128x128xf32>
    %cst_5 = arith.constant dense<0.000000e+00> : vector<8x128xf32>
    %4 = tpu.matmul %2, %3, %cst_5 {dimension_numbers = #tpu.dot_dimension_numbers<[1], [0], [0], [1], [0, 0, 1, 1], [], []>} : vector<8x128xf32>, vector<128x128xf32>, vector<8x128xf32> -> vector<8x128xf32>
    %c0_6 = arith.constant 0 : index
    %c0_7 = arith.constant 0 : index
    %5 = vector.load %arg2[%c0_6, %c0_7] : memref<128x128xf32, #tpu.memory_space<vmem>>, vector<128x128xf32>
    %cst_8 = arith.constant dense<0.000000e+00> : vector<8x128xf32>
    %6 = tpu.matmul %4, %5, %cst_8 {dimension_numbers = #tpu.dot_dimension_numbers<[1], [0], [0], [1], [0, 0, 1, 1], [], []>} : vector<8x128xf32>, vector<128x128xf32>, vector<8x128xf32> -> vector<8x128xf32>
    %c0_9 = arith.constant 0 : index
    %c0_10 = arith.constant 0 : index
    %7 = vector.load %arg3[%c0_9, %c0_10] : memref<8x128xf32, #tpu.memory_space<vmem>>, vector<8x128xf32>
    tpu.vector_store %arg3[%c0_9, %c0_10], %6 {strides = array<i32>} : memref<8x128xf32, #tpu.memory_space<vmem>>, vector<8x128xf32>,
    return
  }
  func.func @transform_0(%arg0: i32) -> (i32, i32) {
    %c0_i32 = arith.constant 0 : i32
    %c0_i32_0 = arith.constant 0 : i32
    return %arg0, %c0_i32 : i32, i32
  }
  func.func @transform_1(%arg0: i32) -> (i32, i32) {
    %c0_i32 = arith.constant 0 : i32
    %c0_i32_0 = arith.constant 0 : i32
    %c0_i32_1 = arith.constant 0 : i32
    return %c0_i32, %c0_i32_0 : i32, i32
  }
  func.func @transform_2(%arg0: i32) -> (i32, i32) {
    %c0_i32 = arith.constant 0 : i32
    %c0_i32_0 = arith.constant 0 : i32
    return %arg0, %c0_i32 : i32, i32
  }
}

</mosaic_0001>

<llo_original>
// kernel: recursive_unit_forward.1
$region0: #{recursive_unit_forward.1}
  #allocation0 [shape = 'u32[]', space=smem, size = 0x4, offset = 0x4, fixed_abs, tag = 'smem constant byte address 0x4 - core index']
  #allocation1 [shape = 'u32[144,128]{1,0:T(1,128)}', space=vmem, size = 0x12000, scoped, tag = 'internal scratch']
  %s0 = inlined_call_operand.vmem [shape: f32[8,128], index: 0, kind: input, shape index: {}, may-alias: {0,2}]
  %s1 = inlined_call_operand.vmem [shape: f32[128,128], index: 1, kind: input, shape index: {}]
  %s2 = inlined_call_operand.vmem [shape: f32[8,128], index: 2, kind: output, shape index: {}, may-alias: {0,2}]
  %s3 = sld [smem:[#allocation0]]
  $region18: #{recursive_unit_forward.1} parent=0
    _
  %s5 = ssub.s32 1, %s3
  %s6 = scalar_select 0, %s5, %s3
  // Predicated region
  $region2: #{recursive_unit_forward.1} parent=0 // pred_check
    _
  $region3: #{recursive_unit_forward.1} parent=0 // pred_check_branch
    %8 = sbr.rel (0) target = $region5
  $region4: #{recursive_unit_forward.1} parent=0 // pred_region
    _
  $region5: #{recursive_unit_forward.1} parent=0 // pred_fallthru
    _
  // Predicated region
  $region6: #{recursive_unit_forward.1} parent=0 // pred_check
    _
  $region7: #{recursive_unit_forward.1} parent=0 // pred_check_branch
    %10 = sbr.rel (0) target = $region9
  $region8: #{recursive_unit_forward.1} parent=0 // pred_region
    _
  $region9: #{recursive_unit_forward.1} parent=0 // pred_fallthru
    _
  %v11 = vld [vmem:[%s0] sm:$0xff]
  %v12 = vld [vmem:[%s1] sm:$0xff]
  %v13 = vld [vmem:[%s1 + $0x8] sm:$0xff]
  %v14 = vld [vmem:[%s1 + $0x10] sm:$0xff]
  %v15 = vld [vmem:[%s1 + $0x18] sm:$0xff]
  %v16 = vld [vmem:[%s1 + $0x20] sm:$0xff]
  %v17 = vld [vmem:[%s1 + $0x28] sm:$0xff]
  %v18 = vld [vmem:[%s1 + $0x30] sm:$0xff]
  %v19 = vld [vmem:[%s1 + $0x38] sm:$0xff]
  %v20 = vld [vmem:[%s1 + $0x40] sm:$0xff]
  %v21 = vld [vmem:[%s1 + $0x48] sm:$0xff]
  %v22 = vld [vmem:[%s1 + $0x50] sm:$0xff]
  %v23 = vld [vmem:[%s1 + $0x58] sm:$0xff]
  %v24 = vld [vmem:[%s1 + $0x60] sm:$0xff]
  %v25 = vld [vmem:[%s1 + $0x68] sm:$0xff]
  %v26 = vld [vmem:[%s1 + $0x70] sm:$0xff]
  %v27 = vld [vmem:[%s1 + $0x78] sm:$0xff]
  %28 = vmatprep.subr.mxu0 0.0
  %29 = vmatpush1.msra.mxu0 %v27
  %30 = vmatprep.subr.mxu0 0.0
  %31 = vmatpush1.msra.mxu0 %v26
  %32 = vmatprep.subr.mxu0 0.0
  %33 = vmatpush1.msra.mxu0 %v25
  %34 = vmatprep.subr.mxu0 0.0
  %35 = vmatpush1.msra.mxu0 %v24
  %36 = vmatprep.subr.mxu0 0.0
  %37 = vmatpush1.msra.mxu0 %v23
  %38 = vmatprep.subr.mxu0 0.0
  %39 = vmatpush1.msra.mxu0 %v22
  %40 = vmatprep.subr.mxu0 0.0
  %41 = vmatpush1.msra.mxu0 %v21
  %42 = vmatprep.subr.mxu0 0.0
  %43 = vmatpush1.msra.mxu0 %v20
  %44 = vmatprep.subr.mxu0 0.0
  %45 = vmatpush1.msra.mxu0 %v19
  %46 = vmatprep.subr.mxu0 0.0
  %47 = vmatpush1.msra.mxu0 %v18
  %48 = vmatprep.subr.mxu0 0.0
  %49 = vmatpush1.msra.mxu0 %v17
  %50 = vmatprep.subr.mxu0 0.0
  %51 = vmatpush1.msra.mxu0 %v16
  %52 = vmatprep.subr.mxu0 0.0
  %53 = vmatpush1.msra.mxu0 %v15
  %54 = vmatprep.subr.mxu0 0.0
  %55 = vmatpush1.msra.mxu0 %v14
  %56 = vmatprep.subr.mxu0 0.0
  %57 = vmatpush1.msra.mxu0 %v13
  %58 = vmatprep.subr.mxu0 0.0
  %59 = vmatpush1.msra.mxu0 %v12
  %60 = vmatprep.subr.mxu0 0.0
  %61 = vmatpush2.msra.mxu0 0.0
  %62 = vmatprep.subr.mxu0 0.0
  %63 = vmatpush2.msra.mxu0 0.0
  %64 = vmatprep.subr.mxu0 0.0
  %65 = vmatpush2.msra.mxu0 0.0
  %66 = vmatprep.subr.mxu0 0.0
  %67 = vmatpush2.msra.mxu0 0.0
  %68 = vmatprep.subr.mxu0 0.0
  %69 = vmatpush2.msra.mxu0 0.0
  %70 = vmatprep.subr.mxu0 0.0
  %71 = vmatpush2.msra.mxu0 0.0
  %72 = vmatprep.subr.mxu0 0.0
  %73 = vmatpush2.msra.mxu0 0.0
  %74 = vmatprep.subr.mxu0 0.0
  %75 = vmatpush2.msra.mxu0 0.0
  %76 = vmatprep.subr.mxu0 0.0
  %77 = vmatpush2.msra.mxu0 0.0
  %78 = vmatprep.subr.mxu0 0.0
  %79 = vmatpush2.msra.mxu0 0.0
  %80 = vmatprep.subr.mxu0 0.0
  %81 = vmatpush2.msra.mxu0 0.0
  %82 = vmatprep.subr.mxu0 0.0
  %83 = vmatpush2.msra.mxu0 0.0
  %84 = vmatprep.subr.mxu0 0.0
  %85 = vmatpush2.msra.mxu0 0.0
  %86 = vmatprep.subr.mxu0 0.0
  %87 = vmatpush2.msra.mxu0 0.0
  %88 = vmatprep.subr.mxu0 0.0
  %89 = vmatpush2.msra.mxu0 0.0
  %90 = vmatprep.subr.mxu0 0.0
  %91 = vmatpush2.msra.mxu0 0.0
  %92 = vmatprep.mubr.f32.mxu0 0.0
  %93 = vmatmul.mubr.f32.gmra.mxu0 %v11
  %v94 = vpop.f32.mrf.mxu0
  %v95 = vadd.f32 0.0, %v94
  %v96 = vpop.f32.mrf.mxu0
  %97 = vdwg.mxu0
  %98 = vmatprep.subr.mxu0 0.0
  %99 = vmatpush1.msra.mxu0 %v27
  %100 = vmatprep.subr.mxu0 0.0
  %101 = vmatpush1.msra.mxu0 %v26
  %102 = vmatprep.subr.mxu0 0.0
  %103 = vmatpush1.msra.mxu0 %v25
  %104 = vmatprep.subr.mxu0 0.0
  %105 = vmatpush1.msra.mxu0 %v24
  %106 = vmatprep.subr.mxu0 0.0
  %107 = vmatpush1.msra.mxu0 %v23
  %108 = vmatprep.subr.mxu0 0.0
  %109 = vmatpush1.msra.mxu0 %v22
  %110 = vmatprep.subr.mxu0 0.0
  %111 = vmatpush1.msra.mxu0 %v21
  %112 = vmatprep.subr.mxu0 0.0
  %113 = vmatpush1.msra.mxu0 %v20
  %114 = vmatprep.subr.mxu0 0.0
  %115 = vmatpush1.msra.mxu0 %v19
  %116 = vmatprep.subr.mxu0 0.0
  %117 = vmatpush1.msra.mxu0 %v18
  %118 = vmatprep.subr.mxu0 0.0
  %119 = vmatpush1.msra.mxu0 %v17
  %120 = vmatprep.subr.mxu0 0.0
  %121 = vmatpush1.msra.mxu0 %v16
  %122 = vmatprep.subr.mxu0 0.0
  %123 = vmatpush1.msra.mxu0 %v15
  %124 = vmatprep.subr.mxu0 0.0
  %125 = vmatpush1.msra.mxu0 %v14
  %126 = vmatprep.subr.mxu0 0.0
  %127 = vmatpush1.msra.mxu0 %v13
  %128 = vmatprep.subr.mxu0 0.0
  %129 = vmatpush1.msra.mxu0 %v12
  %130 = vmatprep.subr.mxu0 0.0
  %131 = vmatpush2.msra.mxu0 0.0
  %132 = vmatprep.subr.mxu0 0.0
  %133 = vmatpush2.msra.mxu0 0.0
  %134 = vmatprep.subr.mxu0 0.0
  %135 = vmatpush2.msra.mxu0 0.0
  %136 = vmatprep.subr.mxu0 0.0
  %137 = vmatpush2.msra.mxu0 0.0
  %138 = vmatprep.subr.mxu0 0.0
  %139 = vmatpush2.msra.mxu0 0.0
  %140 = vmatprep.subr.mxu0 0.0
  %141 = vmatpush2.msra.mxu0 0.0
  %142 = vmatprep.subr.mxu0 0.0
  %143 = vmatpush2.msra.mxu0 0.0
  %144 = vmatprep.subr.mxu0 0.0
  %145 = vmatpush2.msra.mxu0 0.0
  %146 = vmatprep.subr.mxu0 0.0
  %147 = vmatpush2.msra.mxu0 0.0
  %148 = vmatprep.subr.mxu0 0.0
  %149 = vmatpush2.msra.mxu0 0.0
  %150 = vmatprep.subr.mxu0 0.0
  %151 = vmatpush2.msra.mxu0 0.0
  %152 = vmatprep.subr.mxu0 0.0
  %153 = vmatpush2.msra.mxu0 0.0
  %154 = vmatprep.subr.mxu0 0.0
  %155 = vmatpush2.msra.mxu0 0.0
  %156 = vmatprep.subr.mxu0 0.0
  %157 = vmatpush2.msra.mxu0 0.0
  %158 = vmatprep.subr.mxu0 0.0
  %159 = vmatpush2.msra.mxu0 0.0
  %160 = vmatprep.subr.mxu0 0.0
  %161 = vmatpush2.msra.mxu0 0.0
  %162 = vmatprep.mubr.f32.mxu0 0.0
  %163 = vmatmul.mubr.f32.gmra.mxu0 %v95
  %v164 = vpop.f32.mrf.mxu0
  %v165 = vadd.f32 0.0, %v164
  %v166 = vpop.f32.mrf.mxu0
  %167 = vdwg.mxu0
  %168 = vmatprep.subr.mxu0 0.0
  %169 = vmatpush1.msra.mxu0 %v27
  %170 = vmatprep.subr.mxu0 0.0
  %171 = vmatpush1.msra.mxu0 %v26
  %172 = vmatprep.subr.mxu0 0.0
  %173 = vmatpush1.msra.mxu0 %v25
  %174 = vmatprep.subr.mxu0 0.0
  %175 = vmatpush1.msra.mxu0 %v24
  %176 = vmatprep.subr.mxu0 0.0
  %177 = vmatpush1.msra.mxu0 %v23
  %178 = vmatprep.subr.mxu0 0.0
  %179 = vmatpush1.msra.mxu0 %v22
  %180 = vmatprep.subr.mxu0 0.0
  %181 = vmatpush1.msra.mxu0 %v21
  %182 = vmatprep.subr.mxu0 0.0
  %183 = vmatpush1.msra.mxu0 %v20
  %184 = vmatprep.subr.mxu0 0.0
  %185 = vmatpush1.msra.mxu0 %v19
  %186 = vmatprep.subr.mxu0 0.0
  %187 = vmatpush1.msra.mxu0 %v18
  %188 = vmatprep.subr.mxu0 0.0
  %189 = vmatpush1.msra.mxu0 %v17
  %190 = vmatprep.subr.mxu0 0.0
  %191 = vmatpush1.msra.mxu0 %v16
  %192 = vmatprep.subr.mxu0 0.0
  %193 = vmatpush1.msra.mxu0 %v15
  %194 = vmatprep.subr.mxu0 0.0
  %195 = vmatpush1.msra.mxu0 %v14
  %196 = vmatprep.subr.mxu0 0.0
  %197 = vmatpush1.msra.mxu0 %v13
  %198 = vmatprep.subr.mxu0 0.0
  %199 = vmatpush1.msra.mxu0 %v12
  %200 = vmatprep.subr.mxu0 0.0
  %201 = vmatpush2.msra.mxu0 0.0
  %202 = vmatprep.subr.mxu0 0.0
  %203 = vmatpush2.msra.mxu0 0.0
  %204 = vmatprep.subr.mxu0 0.0
  %205 = vmatpush2.msra.mxu0 0.0
  %206 = vmatprep.subr.mxu0 0.0
  %207 = vmatpush2.msra.mxu0 0.0
  %208 = vmatprep.subr.mxu0 0.0
  %209 = vmatpush2.msra.mxu0 0.0
  %210 = vmatprep.subr.mxu0 0.0
  %211 = vmatpush2.msra.mxu0 0.0
  %212 = vmatprep.subr.mxu0 0.0
  %213 = vmatpush2.msra.mxu0 0.0
  %214 = vmatprep.subr.mxu0 0.0
  %215 = vmatpush2.msra.mxu0 0.0
  %216 = vmatprep.subr.mxu0 0.0
  %217 = vmatpush2.msra.mxu0 0.0
  %218 = vmatprep.subr.mxu0 0.0
  %219 = vmatpush2.msra.mxu0 0.0
  %220 = vmatprep.subr.mxu0 0.0
  %221 = vmatpush2.msra.mxu0 0.0
  %222 = vmatprep.subr.mxu0 0.0
  %223 = vmatpush2.msra.mxu0 0.0
  %224 = vmatprep.subr.mxu0 0.0
  %225 = vmatpush2.msra.mxu0 0.0
  %226 = vmatprep.subr.mxu0 0.0
  %227 = vmatpush2.msra.mxu0 0.0
  %228 = vmatprep.subr.mxu0 0.0
  %229 = vmatpush2.msra.mxu0 0.0
  %230 = vmatprep.subr.mxu0 0.0
  %231 = vmatpush2.msra.mxu0 0.0
  %232 = vmatprep.mubr.f32.mxu0 0.0
  %233 = vmatmul.mubr.f32.gmra.mxu0 %v165
  %v234 = vpop.f32.mrf.mxu0
  %v235 = vadd.f32 0.0, %v234
  %v236 = vpop.f32.mrf.mxu0
  %237 = vdwg.mxu0
  %238 = vst [vmem:[%s2] sm:$0xff] %v235
  // Predicated region
  $region10: #{recursive_unit_forward.1} parent=0 // pred_check
    _
  $region11: #{recursive_unit_forward.1} parent=0 // pred_check_branch
    %240 = sbr.rel (0) target = $region13
  $region12: #{recursive_unit_forward.1} parent=0 // pred_region
    _
  $region13: #{recursive_unit_forward.1} parent=0 // pred_fallthru
    _
  // Predicated region
  $region14: #{recursive_unit_forward.1} parent=0 // pred_check
    _
  $region15: #{recursive_unit_forward.1} parent=0 // pred_check_branch
    %242 = sbr.rel (0) target = $region17
  $region16: #{recursive_unit_forward.1} parent=0 // pred_region
    _
  $region17: #{recursive_unit_forward.1} parent=0 // pred_fallthru
    _

</llo_original>
